<compile_context>
chip_gen: v6e
topology: v6e:2x2x1
jax: 0.10.0
libtpu: 0.0.40
codegen_flags: <defaults>
</compile_context>

<pallas_src>
import functools

import jax
import jax.numpy as jnp
from jax.experimental import pallas as pl
from jax.experimental.pallas import tpu as pltpu


def _sa3_kernel(x_ref, w_ref, o_ref, *, groups):
    # x_ref: (Nt, C, HW)   batch tile, spatial flattened onto the lane axis
    # w_ref: (C, 1)        per-channel conv coefficient (convs pre-summed)
    # o_ref: (Nt, C, HW)
    x = x_ref[...]
    w = w_ref[...].astype(jnp.float32)                 # (C, 1)
    nt, c, hw = x.shape
    cg = c // groups
    xw = x.astype(jnp.float32) * w[None, :, :]         # (Nt, C, HW), f32
    for g in range(groups):                            # static, small loop
        sl = slice(g * cg, (g + 1) * cg)
        logit = jnp.sum(xw[:, sl, :], axis=1, keepdims=True)   # (Nt, 1, HW) f32
        gate = jax.nn.sigmoid(logit)                            # f32 sigmoid
        # multiply / store in the input dtype (halves store bytes for bf16)
        o_ref[:, sl, :] = (x[:, sl, :] * gate.astype(x.dtype)).astype(o_ref.dtype)


def _pick_batch_tile(n, c, hw, itemsize):
    """Pick Nt: big blocks (amortize ~0.35us/step), >=2 grid steps when N>=2
    (v7x megacore), and 2x(in)+2x(out) blocks within ~24 MiB of VMEM."""
    target_rows = 1024
    nt = max(1, target_rows // max(c, 1))
    if n >= 2:
        nt = min(nt, n // 2)
    nt = max(1, min(nt, n))
    while n % nt:                                     # keep uniform blocks
        nt -= 1
    budget = 24 * 1024 * 1024
    while nt > 1 and 4 * nt * c * hw * itemsize > budget:
        nt = max(1, nt // 2)
        while n % nt:
            nt -= 1
    return nt


def sa3_forward(x_nchw, w1, w2, w3=None, *, groups=1):
    """SA3.forward.  x: (N, C, H, W); w_k: (groups, C // groups, 1, 1)."""
    N, C, H, W = x_nchw.shape
    assert C % groups == 0
    cg = C // groups
    for w in (w1, w2) + ((w3,) if groups == 3 else ()):
        assert w.shape[:2] == (groups, cg)
        # TODO(synk): ks > 1 (padding=0) produces conv outputs that cannot
        # broadcast against x in the original forward; only ks == 1 is done.
        assert w.shape[2:] == (1, 1), "only ks == 1 is supported"

    # grouped 1x1 convs are linear -> pre-sum the conv weights
    wsum = w1 + w2 + (w3 if groups == 3 else 0.0)
    wvec = wsum.reshape(C, 1)                         # coefficient of channel c

    HW = H * W                                        # lane axis
    x_flat = x_nchw.reshape(N, C, HW)
    nt = _pick_batch_tile(N, C, HW, x_nchw.dtype.itemsize)

    cost = pl.CostEstimate(
        flops=3 * N * C * HW,
        transcendentals=N * groups * HW,
        bytes_accessed=2 * N * C * HW * x_nchw.dtype.itemsize
        + C * wvec.dtype.itemsize,
    )

    out_flat = pl.pallas_call(
        functools.partial(_sa3_kernel, groups=groups),
        out_shape=jax.ShapeDtypeStruct((N, C, HW), x_nchw.dtype),
        grid_spec=pltpu.PrefetchScalarGridSpec(
            num_scalar_prefetch=0,
            grid=(N // nt,),
            in_specs=[
                pl.BlockSpec((nt, C, HW), lambda n: (n, 0, 0)),
                pl.BlockSpec((C, 1), lambda n: (0, 0)),   # constant tiny weight
            ],
            out_specs=pl.BlockSpec((nt, C, HW), lambda n: (n, 0, 0)),
        ),
        compiler_params=pltpu.CompilerParams(
            dimension_semantics=("parallel",)),
        cost_estimate=cost,
    )(x_flat, wvec)
    return out_flat.reshape(N, C, H, W)


def _reference(x, w1, w2, w3, groups):
    # pure-JAX replica of SA3.forward (separate convs, sum, sigmoid, gate)
    N, C, H, W = x.shape
    cg = C // groups
    xg = x.reshape(N, groups, cg, H, W)

    def gconv(w):   # grouped 1x1 conv, out_channels == groups, no bias
        return jnp.einsum('ngchw,gc->nghw', xg, w[:, :, 0, 0])

    s = gconv(w1) + gconv(w2)
    if groups == 3:
        s = s + gconv(w3)
    gate = jax.nn.sigmoid(s)                           # (N, groups, H, W)
    return (xg * gate[:, :, None, :, :]).reshape(N, C, H, W)


if __name__ == "__main__":
    key = jax.random.PRNGKey(0)

    # --- main config: groups == 3 branch (the "SA3" path) -------------------
    N, C, H, W = 2, 12, 16, 16
    groups, ks = 3, 1
    cg = C // groups
    k_x, k1, k2, k3 = jax.random.split(key, 4)
    x = jax.random.normal(k_x, (N, C, H, W), dtype=jnp.float32)
    w1 = jax.random.normal(k1, (groups, cg, ks, ks), dtype=jnp.float32) * 0.2
    w2 = jax.random.normal(k2, (groups, cg, ks, ks), dtype=jnp.float32) * 0.2
    w3 = jax.random.normal(k3, (groups, cg, ks, ks), dtype=jnp.float32) * 0.2

    out = jax.block_until_ready(sa3_forward(x, w1, w2, w3, groups=groups))
    ref = _reference(x, w1, w2, w3, groups)
    assert out.shape == (N, C, H, W)
    assert jnp.allclose(out, ref, atol=1e-5, rtol=1e-5), "groups=3 mismatch"

    # --- else branch: groups == 1 (two convs only) ---------------------------
    N1, C1 = 2, 8
    k_x1, k11, k21 = jax.random.split(jax.random.PRNGKey(1), 3)
    x1 = jax.random.normal(k_x1, (N1, C1, H, W), dtype=jnp.float32)
    w11 = jax.random.normal(k11, (1, C1, 1, 1), dtype=jnp.float32) * 0.2
    w21 = jax.random.normal(k21, (1, C1, 1, 1), dtype=jnp.float32) * 0.2

    out1 = jax.block_until_ready(sa3_forward(x1, w11, w21, groups=1))
    ref1 = _reference(x1, w11, w21, None, 1)
    assert jnp.allclose(out1, ref1, atol=1e-5, rtol=1e-5), "groups=1 mismatch"

    print("KERNEL_OK")
</pallas_src>

<mosaic_0001>
module attributes {stable_mosaic.version = 11 : i64} {
  func.func @_sa3_kernel(%arg0: i32, %arg1: memref<1x12x256xf32, #tpu.memory_space<vmem>>, %arg2: memref<12x1xf32, #tpu.memory_space<vmem>>, %arg3: memref<1x12x256xf32, #tpu.memory_space<vmem>>) attributes {dimension_semantics = [#tpu.dimension_semantics<parallel>], iteration_bounds = array<i64: 2>, scalar_prefetch = 0 : i64, scratch_operands = 0 : i64, tpu.core_type = #tpu.core_type<tc>, window_params = [{transform_indices = @transform_0, window_bounds = array<i64: 1, 12, 256>}, {pipeline_mode = #tpu.pipeline_mode<synchronous>, transform_indices = @transform_1, window_bounds = array<i64: 12, 1>}, {transform_indices = @transform_2, window_bounds = array<i64: 1, 12, 256>}]} {
    %c0 = arith.constant 0 : index
    %c0_0 = arith.constant 0 : index
    %c0_1 = arith.constant 0 : index
    %0 = vector.load %arg1[%c0, %c0_0, %c0_1] : memref<1x12x256xf32, #tpu.memory_space<vmem>>, vector<1x12x256xf32>
    %c0_2 = arith.constant 0 : index
    %c0_3 = arith.constant 0 : index
    %1 = vector.load %arg2[%c0_2, %c0_3] : memref<12x1xf32, #tpu.memory_space<vmem>>, vector<12x1xf32>
    %2 = vector.shape_cast %1 : vector<12x1xf32> to vector<1x12x1xf32>
    %3 = vector.broadcast %2 : vector<1x12x1xf32> to vector<1x12x256xf32>
    %4 = arith.mulf %0, %3 : vector<1x12x256xf32>
    %5 = vector.extract_strided_slice %4 {offsets = [0, 0, 0], sizes = [1, 4, 256], strides = [1, 1, 1]} : vector<1x12x256xf32> to vector<1x4x256xf32>
    %cst = arith.constant dense<0.000000e+00> : vector<1x256xf32>
    %6 = vector.multi_reduction <add>, %5, %cst [1] : vector<1x4x256xf32> to vector<1x256xf32>
    %7 = vector.shape_cast %6 : vector<1x256xf32> to vector<1x1x256xf32>
    %8 = arith.negf %7 : vector<1x1x256xf32>
    %9 = math.exp %8 : vector<1x1x256xf32>
    %cst_4 = arith.constant 1.000000e+00 : f32
    %10 = vector.broadcast %cst_4 : f32 to vector<1x1x256xf32>
    %11 = arith.addf %10, %9 : vector<1x1x256xf32>
    %12 = arith.divf %10, %11 : vector<1x1x256xf32>
    %13 = vector.extract_strided_slice %0 {offsets = [0, 0, 0], sizes = [1, 4, 256], strides = [1, 1, 1]} : vector<1x12x256xf32> to vector<1x4x256xf32>
    %14 = vector.broadcast %12 : vector<1x1x256xf32> to vector<1x4x256xf32>
    %15 = arith.mulf %13, %14 : vector<1x4x256xf32>
    %c0_5 = arith.constant 0 : index
    %c0_6 = arith.constant 0 : index
    %c0_7 = arith.constant 0 : index
    %16 = vector.load %arg3[%c0_5, %c0_6, %c0_7] : memref<1x12x256xf32, #tpu.memory_space<vmem>>, vector<1x4x256xf32>
    tpu.vector_store %arg3[%c0_5, %c0_6, %c0_7], %15 {strides = array<i32>} : memref<1x12x256xf32, #tpu.memory_space<vmem>>, vector<1x4x256xf32>,
    %17 = vector.extract_strided_slice %4 {offsets = [0, 4, 0], sizes = [1, 4, 256], strides = [1, 1, 1]} : vector<1x12x256xf32> to vector<1x4x256xf32>
    %cst_8 = arith.constant dense<0.000000e+00> : vector<1x256xf32>
    %18 = vector.multi_reduction <add>, %17, %cst_8 [1] : vector<1x4x256xf32> to vector<1x256xf32>
    %19 = vector.shape_cast %18 : vector<1x256xf32> to vector<1x1x256xf32>
    %20 = arith.negf %19 : vector<1x1x256xf32>
    %21 = math.exp %20 : vector<1x1x256xf32>
    %cst_9 = arith.constant 1.000000e+00 : f32
    %22 = vector.broadcast %cst_9 : f32 to vector<1x1x256xf32>
    %23 = arith.addf %22, %21 : vector<1x1x256xf32>
    %24 = arith.divf %22, %23 : vector<1x1x256xf32>
    %25 = vector.extract_strided_slice %0 {offsets = [0, 4, 0], sizes = [1, 4, 256], strides = [1, 1, 1]} : vector<1x12x256xf32> to vector<1x4x256xf32>
    %26 = vector.broadcast %24 : vector<1x1x256xf32> to vector<1x4x256xf32>
    %27 = arith.mulf %25, %26 : vector<1x4x256xf32>
    %c0_10 = arith.constant 0 : index
    %c4 = arith.constant 4 : index
    %c0_11 = arith.constant 0 : index
    %28 = vector.load %arg3[%c0_10, %c4, %c0_11] : memref<1x12x256xf32, #tpu.memory_space<vmem>>, vector<1x4x256xf32>
    tpu.vector_store %arg3[%c0_10, %c4, %c0_11], %27 {strides = array<i32>} : memref<1x12x256xf32, #tpu.memory_space<vmem>>, vector<1x4x256xf32>,
    %29 = vector.extract_strided_slice %4 {offsets = [0, 8, 0], sizes = [1, 4, 256], strides = [1, 1, 1]} : vector<1x12x256xf32> to vector<1x4x256xf32>
    %cst_12 = arith.constant dense<0.000000e+00> : vector<1x256xf32>
    %30 = vector.multi_reduction <add>, %29, %cst_12 [1] : vector<1x4x256xf32> to vector<1x256xf32>
    %31 = vector.shape_cast %30 : vector<1x256xf32> to vector<1x1x256xf32>
    %32 = arith.negf %31 : vector<1x1x256xf32>
    %33 = math.exp %32 : vector<1x1x256xf32>
    %cst_13 = arith.constant 1.000000e+00 : f32
    %34 = vector.broadcast %cst_13 : f32 to vector<1x1x256xf32>
    %35 = arith.addf %34, %33 : vector<1x1x256xf32>
    %36 = arith.divf %34, %35 : vector<1x1x256xf32>
    %37 = vector.extract_strided_slice %0 {offsets = [0, 8, 0], sizes = [1, 4, 256], strides = [1, 1, 1]} : vector<1x12x256xf32> to vector<1x4x256xf32>
    %38 = vector.broadcast %36 : vector<1x1x256xf32> to vector<1x4x256xf32>
    %39 = arith.mulf %37, %38 : vector<1x4x256xf32>
    %c0_14 = arith.constant 0 : index
    %c8 = arith.constant 8 : index
    %c0_15 = arith.constant 0 : index
    %40 = vector.load %arg3[%c0_14, %c8, %c0_15] : memref<1x12x256xf32, #tpu.memory_space<vmem>>, vector<1x4x256xf32>
    tpu.vector_store %arg3[%c0_14, %c8, %c0_15], %39 {strides = array<i32>} : memref<1x12x256xf32, #tpu.memory_space<vmem>>, vector<1x4x256xf32>,
    return
  }
  func.func @transform_0(%arg0: i32) -> (i32, i32, i32) {
    %c0_i32 = arith.constant 0 : i32
    %c0_i32_0 = arith.constant 0 : i32
    %c0_i32_1 = arith.constant 0 : i32
    return %arg0, %c0_i32, %c0_i32_0 : i32, i32, i32
  }
  func.func @transform_1(%arg0: i32) -> (i32, i32) {
    %c0_i32 = arith.constant 0 : i32
    %c0_i32_0 = arith.constant 0 : i32
    %c0_i32_1 = arith.constant 0 : i32
    return %c0_i32, %c0_i32_0 : i32, i32
  }
  func.func @transform_2(%arg0: i32) -> (i32, i32, i32) {
    %c0_i32 = arith.constant 0 : i32
    %c0_i32_0 = arith.constant 0 : i32
    %c0_i32_1 = arith.constant 0 : i32
    return %arg0, %c0_i32, %c0_i32_0 : i32, i32, i32
  }
}

</mosaic_0001>

<llo_original>
// kernel: tpu_custom_call.1
$region0: #{tpu_custom_call.1}
  #allocation0 [shape = 'u32[]', space=smem, size = 0x4, offset = 0x4, fixed_abs, tag = 'smem constant byte address 0x4 - core index']
  #allocation1 [shape = 'u32[144,128]{1,0:T(1,128)}', space=vmem, size = 0x12000, scoped, tag = 'internal scratch']
  %s0 = inlined_call_operand.vmem [shape: f32[2,12,256], index: 0, kind: input, shape index: {}]
  %s1 = inlined_call_operand.vmem [shape: f32[12,1], index: 1, kind: input, shape index: {}]
  %s2 = inlined_call_operand.vmem [shape: f32[2,12,256], index: 2, kind: output, shape index: {}]
  %s3 = sld [smem:[#allocation0]]
  $region41: #{tpu_custom_call.1} parent=0
    _
  %s5 = ssub.s32 1, %s3
  %s6 = scalar_select 0, %s5, %s3
  loop: start=0, step=1, limit=4
  $region2: #{tpu_custom_call.1} parent=0 // loop_pre_header
    _
  $region3: #{tpu_custom_call.1} parent=0 // loop_header
    %s8 = sphi 0, %s12
    %p9 = scmp.ge.s32.totalorder %s8, 4
    %s18 = sphi 0, %s20
    %s21 = sphi 0, %s18
    %s22 = sphi 0, %s21
    %s38 = sphi 0, %s22
    %s42 = sphi 0, %s42
    %s44 = sphi 0, %s42
    %s45 = sphi 0, %s44
    %s59 = sphi 0, %s45
    %s65 = sphi 0, %s67
    %s68 = sphi 0, %s65
    %s69 = sphi 0, %s68
    %s85 = sphi 0, %s69
  $region4: #{tpu_custom_call.1} parent=0 // loop_header_branch
    %11 = sbr.rel (%p9) target = $region8
  $region5: #{tpu_custom_call.1} parent=0 // loop_body
    %s13 = ssub.s32 %s8, 1
    %s14 = ssub.s32 %s8, 2
    %s15 = sadd.s32 %s8, 1
    %s16 = ssub.s32 %s8, %s15
    %p17 = scmp.eq.s32.totalorder %s16, 0
    %s19 = sadd.s32 %s18, 1
    %s20 = scalar_select %p17, %s18, %s19
    %p23 = pneg %p17
    %p24 = scmp.eq.s32.totalorder %s8, 1
    %p25 = por %p23, %p24
    %p26 = scmp.ne.s32.totalorder %s18, %s21
    %p27 = scmp.eq.s32.totalorder %s8, 0
    %p28 = por %p26, %p27
    %p29 = scmp.ne.s32.totalorder %s18, %s21
    %p30 = scmp.eq.s32.totalorder %s13, 1
    %p31 = por %p29, %p30
    %p32 = scmp.ne.s32.totalorder %s21, %s22
    %p33 = scmp.eq.s32.totalorder %s13, 0
    %p34 = por %p32, %p33
    %p35 = scmp.ne.s32.totalorder %s21, %s22
    %p36 = scmp.eq.s32.totalorder %s14, 1
    %p37 = por %p35, %p36
    %p39 = scmp.ne.s32.totalorder %s22, %s38
    %p40 = scmp.eq.s32.totalorder %s14, 0
    %p41 = por %p39, %p40
    %s43 = sadd.s32 %s42, 1
    %p46 = scmp.eq.s32.totalorder %s8, 1
    %p47 = scmp.ne.s32.totalorder %s42, %s44
    %p48 = scmp.eq.s32.totalorder %s8, 0
    %p49 = por %p47, %p48
    %p50 = scmp.ne.s32.totalorder %s42, %s44
    %p51 = scmp.eq.s32.totalorder %s13, 1
    %p52 = por %p50, %p51
    %p53 = scmp.ne.s32.totalorder %s44, %s45
    %p54 = scmp.eq.s32.totalorder %s13, 0
    %p55 = por %p53, %p54
    %p56 = scmp.ne.s32.totalorder %s44, %s45
    %p57 = scmp.eq.s32.totalorder %s14, 1
    %p58 = por %p56, %p57
    %p60 = scmp.ne.s32.totalorder %s45, %s59
    %p61 = scmp.eq.s32.totalorder %s14, 0
    %p62 = por %p60, %p61
    %s63 = ssub.s32 %s8, %s15
    %p64 = scmp.eq.s32.totalorder %s63, 0
    %s66 = sadd.s32 %s65, 1
    %s67 = scalar_select %p64, %s65, %s66
    %p70 = pneg %p64
    %p71 = scmp.eq.s32.totalorder %s8, 1
    %p72 = por %p70, %p71
    %p73 = scmp.ne.s32.totalorder %s65, %s68
    %p74 = scmp.eq.s32.totalorder %s8, 0
    %p75 = por %p73, %p74
    %p76 = scmp.ne.s32.totalorder %s65, %s68
    %p77 = scmp.eq.s32.totalorder %s13, 1
    %p78 = por %p76, %p77
    %p79 = scmp.ne.s32.totalorder %s68, %s69
    %p80 = scmp.eq.s32.totalorder %s13, 0
    %p81 = por %p79, %p80
    %p82 = scmp.ne.s32.totalorder %s68, %s69
    %p83 = scmp.eq.s32.totalorder %s14, 1
    %p84 = por %p82, %p83
    %p86 = scmp.ne.s32.totalorder %s69, %s85
    %p87 = scmp.eq.s32.totalorder %s14, 0
    %p88 = por %p86, %p87
    %p89 = scmp.le.s32.totalorder 1, %s8
    %p90 = scmp.lt.s32.totalorder %s8, 3
    %p91 = pnand %p89, %p90
    %p92 = pneg %p91
    // Predicated region
    $region9: #{tpu_custom_call.1} parent=5 // pred_check
      _
    $region10: #{tpu_custom_call.1} parent=5 // pred_check_branch
      %94 = sbr.rel (%p91) target = $region12
    $region11: #{tpu_custom_call.1} parent=5 // pred_region
      %s95 = ssub.s32 %s8, 1
      // Predicated region
      $region13: #{tpu_custom_call.1} parent=11 // pred_check
        %p96 = pneg %p55
      $region14: #{tpu_custom_call.1} parent=11 // pred_check_branch
        %98 = sbr.rel (%p96) target = $region16
      $region15: #{tpu_custom_call.1} parent=11 // pred_region
        _
      $region16: #{tpu_custom_call.1} parent=11 // pred_fallthru
        _
    $region12: #{tpu_custom_call.1} parent=5 // pred_fallthru
      _
    %p99 = scmp.lt.s32.totalorder %s8, 2
    // Predicated region
    $region17: #{tpu_custom_call.1} parent=5 // pred_check
      %p100 = pneg %p99
    $region18: #{tpu_custom_call.1} parent=5 // pred_check_branch
      %102 = sbr.rel (%p100) target = $region20
    $region19: #{tpu_custom_call.1} parent=5 // pred_region
      // Predicated region
      $region21: #{tpu_custom_call.1} parent=19 // pred_check
        %p103 = pneg %p28
      $region22: #{tpu_custom_call.1} parent=19 // pred_check_branch
        %105 = sbr.rel (%p103) target = $region24
      $region23: #{tpu_custom_call.1} parent=19 // pred_region
        %p106 = scmp.lt.s32.totalorder %s8, 1
        %s107 = scalar_select %p106, %s8, 1
        %s108 = smul.addr %s107, 4
        %s109 = smul.addr %s108, 8
        %s110 = scalar_lea.vmem %s0, %s109
      $region24: #{tpu_custom_call.1} parent=19 // pred_fallthru
        _
    $region20: #{tpu_custom_call.1} parent=5 // pred_fallthru
      _
    %p111 = scmp.le.s32.totalorder 1, %s8
    %p112 = scmp.lt.s32.totalorder %s8, 3
    %p113 = pnand %p111, %p112
    %p114 = pneg %p113
    // Predicated region
    $region25: #{tpu_custom_call.1} parent=5 // pred_check
      _
    $region26: #{tpu_custom_call.1} parent=5 // pred_check_branch
      %116 = sbr.rel (%p113) target = $region28
    $region27: #{tpu_custom_call.1} parent=5 // pred_region
      %s117 = ssub.s32 %s8, 1
      %p118 = scmp.lt.s32.totalorder %s13, 1
      %s119 = scalar_select %p118, %s13, 1
      %s120 = smul.addr %s119, 4
      %s121 = smul.addr %s120, 8
      %s122 = scalar_lea.vmem %s0, %s121
      %p123 = pneg %p34
      %p124 = pneg %p31
      %p125 = pneg %p55
      %p126 = pneg %p52
      %p127 = pneg %p81
      %p128 = pneg %p78
      %p129 = scmp.lt.s32.totalorder %s13, 1
      %s130 = scalar_select %p129, %s13, 1
      %s131 = smul.addr %s130, 4
      %s132 = smul.addr %s131, 8
      %s133 = scalar_lea.vmem %s2, %s132
      %p134 = scmp.lt.s32.totalorder %s13, 1
      %s135 = scalar_select %p134, %s13, 1
      %s136 = smul.addr %s135, 4
      %s137 = smul.addr %s136, 8
      %s138 = scalar_lea.vmem %s0, %s137
      %p139 = scmp.lt.s32.totalorder %s13, 1
      %s140 = scalar_select %p139, %s13, 1
      %s141 = smul.addr %s140, 4
      %s142 = smul.addr %s141, 8
      %s143 = scalar_lea.vmem %s2, %s142
      %v144 = vld [vmem:[%s138] sm:$0xff]
      %v145 = vld [vmem:[%s138 + $0x8] sm:$0xff]
      %v146 = vld [vmem:[%s138 + $0x10] sm:$0xf]
      %v147 = vld [vmem:[%s138 + $0x18] sm:$0xf]
      %v148 = vld [vmem:[%s1] sm:$0xff]
      %v149 = vld [vmem:[%s1 + $0x8] sm:$0xf]
      %151 = vset.pattern.permute.xlu0 0
      %152 = vperm.xlu0 %151, %v148
      %v153 = vpop.permute.xlu0 %152
      %156 = vset.pattern.permute.xlu0 0
      %157 = vperm.xlu0 %156, %v149
      %v158 = vpop.permute.xlu0 %157
      %v160 = vmul.f32 %v144, %v153
      %v161 = vmul.f32 %v145, %v153
      %v162 = vmul.f32 %v146, %v158
      %v163 = vmul.f32 %v147, %v158
      %vm164 = vcmask 1043456
      %v165 = vsel %vm164, %v160, 0.0
      %v166 = vrot.slane %v165, 4
      %v167 = vadd.f32 %v165, %v166
      %v168 = vrot.slane %v167, 2
      %v169 = vadd.f32 %v167, %v168
      %v170 = vrot.slane %v169, 1
      %v171 = vadd.f32 %v169, %v170
      %v172 = vsel %vm164, %v161, 0.0
      %v173 = vrot.slane %v172, 4
      %v174 = vadd.f32 %v172, %v173
      %v175 = vrot.slane %v174, 2
      %v176 = vadd.f32 %v174, %v175
      %v177 = vrot.slane %v176, 1
      %v178 = vadd.f32 %v176, %v177
      %v179 = vxor.u32 %v171, 2147483648
      %v180 = vxor.u32 %v178, 2147483648
      %v181 = vmul.f32 %v179, 1.442695
      %v182 = vpow.pop %v181
      %v183 = vmul.f32 %v180, 1.442695
      %v184 = vpow.pop %v183
      %v185 = vadd.f32 %v182, 1.0
      %v186 = vadd.f32 %v184, 1.0
      %v187 = vrcp.pop %v185
      %v188 = vmul.f32 1.0, %v187
      %v189 = vrcp.pop %v186
      %v190 = vmul.f32 1.0, %v189
      %v191 = vmul.f32 %v144, %v188
      %v192 = vmul.f32 %v145, %v190
      %193 = vst [vmem:[%s143] sm:$0xf] %v191
      %194 = vst [vmem:[%s143 + $0x8] sm:$0xf] %v192
      %v197 = vrot.slane %v160, 4
      %v198 = vrot.slane %v161, 4
      %v201 = vsel %vm164, %v197, 0.0
      %v202 = vrot.slane %v201, 4
      %v203 = vadd.f32 %v201, %v202
      %v204 = vrot.slane %v203, 2
      %v205 = vadd.f32 %v203, %v204
      %v206 = vrot.slane %v205, 1
      %v207 = vadd.f32 %v205, %v206
      %v208 = vsel %vm164, %v198, 0.0
      %v209 = vrot.slane %v208, 4
      %v210 = vadd.f32 %v208, %v209
      %v211 = vrot.slane %v210, 2
      %v212 = vadd.f32 %v210, %v211
      %v213 = vrot.slane %v212, 1
      %v214 = vadd.f32 %v212, %v213
      %v215 = vxor.u32 %v207, 2147483648
      %v216 = vxor.u32 %v214, 2147483648
      %v217 = vmul.f32 %v215, 1.442695
      %v218 = vpow.pop %v217
      %v219 = vmul.f32 %v216, 1.442695
      %v220 = vpow.pop %v219
      %v221 = vadd.f32 %v218, 1.0
      %v222 = vadd.f32 %v220, 1.0
      %v223 = vrcp.pop %v221
      %v224 = vmul.f32 1.0, %v223
      %v225 = vrcp.pop %v222
      %v226 = vmul.f32 1.0, %v225
      %v227 = vmul.f32 %v144, %v224
      %v228 = vmul.f32 %v145, %v226
      %229 = vst [vmem:[%s143] sm:$0xf0] %v227
      %230 = vst [vmem:[%s143 + $0x8] sm:$0xf0] %v228
      %v231 = vsel %vm164, %v162, 0.0
      %v232 = vrot.slane %v231, 4
      %v233 = vadd.f32 %v231, %v232
      %v234 = vrot.slane %v233, 2
      %v235 = vadd.f32 %v233, %v234
      %v236 = vrot.slane %v235, 1
      %v237 = vadd.f32 %v235, %v236
      %v238 = vsel %vm164, %v163, 0.0
      %v239 = vrot.slane %v238, 4
      %v240 = vadd.f32 %v238, %v239
      %v241 = vrot.slane %v240, 2
      %v242 = vadd.f32 %v240, %v241
      %v243 = vrot.slane %v242, 1
      %v244 = vadd.f32 %v242, %v243
      %v245 = vxor.u32 %v237, 2147483648
      %v246 = vxor.u32 %v244, 2147483648
      %v247 = vmul.f32 %v245, 1.442695
      %v248 = vpow.pop %v247
      %v249 = vmul.f32 %v246, 1.442695
      %v250 = vpow.pop %v249
      %v251 = vadd.f32 %v248, 1.0
      %v252 = vadd.f32 %v250, 1.0
      %v253 = vrcp.pop %v251
      %v254 = vmul.f32 1.0, %v253
      %v255 = vrcp.pop %v252
      %v256 = vmul.f32 1.0, %v255
      %v257 = vmul.f32 %v146, %v254
      %v258 = vmul.f32 %v147, %v256
      %259 = vst [vmem:[%s143 + $0x10] sm:$0xf] %v257
      %260 = vst [vmem:[%s143 + $0x18] sm:$0xf] %v258
      %p261 = scmp.lt.s32.totalorder %s13, 1
      %s262 = scalar_select %p261, %s13, 1
      %s263 = smul.addr %s262, 4
      %s264 = smul.addr %s263, 8
      %s265 = scalar_lea.vmem %s2, %s264
      // Predicated region
      $region29: #{tpu_custom_call.1} parent=27 // pred_check
        %p266 = pneg %p78
      $region30: #{tpu_custom_call.1} parent=27 // pred_check_branch
        %268 = sbr.rel (%p266) target = $region32
      $region31: #{tpu_custom_call.1} parent=27 // pred_region
        _
      $region32: #{tpu_custom_call.1} parent=27 // pred_fallthru
        _
    $region28: #{tpu_custom_call.1} parent=5 // pred_fallthru
      _
    %p269 = scmp.le.s32.totalorder 2, %s8
    // Predicated region
    $region33: #{tpu_custom_call.1} parent=5 // pred_check
      %p270 = pneg %p269
    $region34: #{tpu_custom_call.1} parent=5 // pred_check_branch
      %272 = sbr.rel (%p270) target = $region36
    $region35: #{tpu_custom_call.1} parent=5 // pred_region
      %s273 = ssub.s32 %s8, 2
      // Predicated region
      $region37: #{tpu_custom_call.1} parent=35 // pred_check
        %p274 = pneg %p84
      $region38: #{tpu_custom_call.1} parent=35 // pred_check_branch
        %276 = sbr.rel (%p274) target = $region40
      $region39: #{tpu_custom_call.1} parent=35 // pred_region
        %p277 = scmp.lt.s32.totalorder %s14, 1
        %s278 = scalar_select %p277, %s14, 1
        %s279 = smul.addr %s278, 4
        %s280 = smul.addr %s279, 8
        %s281 = scalar_lea.vmem %s2, %s280
      $region40: #{tpu_custom_call.1} parent=35 // pred_fallthru
        _
    $region36: #{tpu_custom_call.1} parent=5 // pred_fallthru
      _
  $region6: #{tpu_custom_call.1} parent=0 // loop_footer
    %s12 = sadd.s32 1, %s8
  $region7: #{tpu_custom_call.1} parent=0 // loop_footer_branch
    %7 = sbr.rel target = $region3
  $region8: #{tpu_custom_call.1} parent=0 // loop_exit
    _

</llo_original>
